<compile_context>
chip_gen: v7x
topology: tpu7x:2x2x1
jax: 0.10.0
libtpu: 0.0.40
codegen_flags: <defaults>
</compile_context>

<pallas_src>
import jax
import jax.numpy as jnp
from jax.experimental import pallas as pl
from jax.experimental.pallas import tpu as pltpu


def _emotion_kernel(frames_ref,            # VMEM: (bs, T_pad, F) f32 waveform frames
                    mask_ref,              # VMEM: (bs, T_pad, 1) f32 valid-frame mask
                    w_feat_ref, b_feat_ref,     # (F, D) bf16, (1, D) f32
                    w_cat_ref, b_cat_ref,       # (D, 2H) bf16, (1, 2H) f32  [att1 | fc1 fused]
                    v_row_ref, b_v_ref,         # (1, H) f32, (1, 1) f32
                    w_fc2_ref, b_fc2_ref,       # (H, C_pad) bf16, (1, C_pad) f32
                    out_ref):              # VMEM: (bs, 1, C_pad) f32 logits
    bs, T_pad, F = frames_ref.shape
    H2 = w_cat_ref.shape[1]
    H = H2 // 2

    # ---- stand-in frozen encoder: per-step [bs*T_pad, F] @ [F, D] matmul.
    # Cast frames to bf16 in-kernel (hidden under the pipeline) and keep the
    # projection result in bf16 — no full f32 intermediate + cast pass.
    frames = frames_ref[...].reshape(bs * T_pad, F).astype(w_feat_ref.dtype)
    feats = (jnp.dot(frames, w_feat_ref[...], preferred_element_type=jnp.float32)
             + b_feat_ref[...]).astype(w_cat_ref.dtype)                         # [rows, D] bf16

    # ---- fused attention-hidden + classifier-fc1 projection: [rows, D] @ [D, 2H]
    fused = jnp.dot(feats, w_cat_ref[...],
                    preferred_element_type=jnp.float32) + b_cat_ref[...]        # [rows, 2H] f32
    fused3 = fused.reshape(bs, T_pad, H2)                                       # layout-free (T_pad % 16 == 0)
    att_h = jnp.tanh(fused3[:, :, :H])                                          # [bs, T, H]
    hid_pre = fused3[:, :, H:]                                                  # [bs, T, H] fc1 pre-act

    # ---- attention scores on the VPU/XLU (multiply + lane reduce, no N=1 MXU matmul)
    scores = jnp.sum(att_h * v_row_ref[...], axis=-1, keepdims=True) + b_v_ref[...]   # [bs, T, 1]

    # ---- masked softmax over time (f32)
    mask_f = mask_ref[...]                                                      # [bs, T, 1]
    masked = jnp.where(mask_f > 0.0, scores, jnp.float32(-1e30))
    m = jnp.max(masked, axis=1, keepdims=True)                                  # [bs, 1, 1]
    e = jnp.exp(masked - m) * mask_f
    denom = jnp.maximum(jnp.sum(e, axis=1, keepdims=True), jnp.float32(1e-20))  # guard length==0
    attn = e * pl.reciprocal(denom, approx=True)                                # [bs, T, 1]

    # ---- attention pooling of fc1 pre-activations (pool . fc1 == fc1 . pool), then ReLU
    pooled = jnp.sum(attn * hid_pre, axis=1)                                    # [bs, H]
    hidden = jnp.maximum(pooled, 0.0)                                           # dropout = identity

    # ---- final classifier layer (classes padded to a full 128-lane store)
    logits = jnp.dot(hidden.astype(w_fc2_ref.dtype), w_fc2_ref[...],
                     preferred_element_type=jnp.float32) + b_fc2_ref[...]       # [bs, C_pad]
    out_ref[...] = logits.reshape(bs, 1, logits.shape[-1]).astype(out_ref.dtype)


def emotion_model_forward(waveforms, lengths, params, *, hop, samples_per_step=1):
    """waveforms: [B, 1, T_in] f32 ; lengths: [B] int32 ; returns logits [B, C] f32."""
    x = jnp.squeeze(waveforms, axis=1) if waveforms.ndim == 3 else waveforms    # [B, T_in]
    B, T_in = x.shape
    F = hop
    T_out = T_in // hop
    D = params["w_feat"].shape[1]
    H = params["w_att1"].shape[1]
    C = params["w_fc2"].shape[1]

    # Pad the time axis to a multiple of 16 (bf16 sublane tile) so in-kernel reshapes
    # and time reductions stay tile-aligned; mask zeros the padded tail.
    T_pad = ((T_out + 15) // 16) * 16
    # Samples per grid step; at real HuBERT sizes pick bs so bs*T_pad is a multiple
    # of 256 (full MXU passes on v6e/v7x).  Batch is padded to a multiple of bs.
    bs = max(1, min(int(samples_per_step), B))
    B_pad = ((B + bs - 1) // bs) * bs
    n_steps = B_pad // bs

    # frame the waveform (glue): [B_pad, T_pad, F]; padded rows/frames are zero.
    frames = x[:, : T_out * hop].reshape(B, T_out, F)
    frames = jnp.pad(frames, ((0, B_pad - B), (0, T_pad - T_out), (0, 0)))

    # downsampled_lengths = (lengths.float() * T_out / T_in).long()  (matches torch)
    lengths_p = jnp.pad(lengths.astype(jnp.int32), (0, B_pad - B))
    ds_lens = (lengths_p.astype(jnp.float32) * T_out / T_in).astype(jnp.int32)
    mask = (jnp.arange(T_pad, dtype=jnp.int32)[None, :] < ds_lens[:, None])
    mask3 = mask.astype(jnp.float32)[:, :, None]                                # [B_pad, T_pad, 1]

    # fuse attention-hidden and classifier-fc1 projections into one [D, 2H] weight
    w_cat = jnp.concatenate([params["w_att1"], params["w_fc1"]], axis=1)        # [D, 2H]
    b_cat = jnp.concatenate([params["b_att1"], params["b_fc1"]], axis=1)        # [1, 2H]
    v_row = params["v_att"].reshape(1, H)                                       # [1, H]

    # pad classes to a full 128-lane block (lane-dense final matmul + store)
    C_pad = ((C + 127) // 128) * 128
    w_fc2 = jnp.pad(params["w_fc2"], ((0, 0), (0, C_pad - C)))
    b_fc2 = jnp.pad(params["b_fc2"], ((0, 0), (0, C_pad - C)))

    # bf16 matmul weights, f32 accumulation; frames are cast in-kernel per tile.
    mm = jnp.bfloat16
    w_feat = params["w_feat"].astype(mm)
    w_cat = w_cat.astype(mm)
    w_fc2 = w_fc2.astype(mm)

    const2 = lambda i: (0, 0)   # weights: constant block index -> stay VMEM-resident

    out = pl.pallas_call(
        _emotion_kernel,
        out_shape=jax.ShapeDtypeStruct((B_pad, 1, C_pad), jnp.float32),
        grid=(n_steps,),                                   # tile over batch blocks
        in_specs=[
            pl.BlockSpec((bs, T_pad, F), lambda i: (i, 0, 0)),   # frames (per batch block)
            pl.BlockSpec((bs, T_pad, 1), lambda i: (i, 0, 0)),   # mask
            pl.BlockSpec((F, D), const2), pl.BlockSpec((1, D), const2),          # w_feat, b_feat
            pl.BlockSpec((D, 2 * H), const2), pl.BlockSpec((1, 2 * H), const2),  # w_cat,  b_cat
            pl.BlockSpec((1, H), const2), pl.BlockSpec((1, 1), const2),          # v_row,  b_v
            pl.BlockSpec((H, C_pad), const2), pl.BlockSpec((1, C_pad), const2),  # w_fc2,  b_fc2
        ],
        out_specs=pl.BlockSpec((bs, 1, C_pad), lambda i: (i, 0, 0)),
        compiler_params=pltpu.CompilerParams(
            dimension_semantics=("parallel",),             # shards batch steps across v7x TCs
            vmem_limit_bytes=32 * 1024 * 1024),            # per-step tiles are small everywhere
    )(frames, mask3,
      w_feat, params["b_feat"],
      w_cat, b_cat,
      v_row, params["b_v"],
      w_fc2, b_fc2)

    return out[:B, 0, :C]


def init_params(key, *, frame_len, feature_dim, hidden_dim, num_classes):
    ks = jax.random.split(key, 6)

    def lin(k, fan_in, shape):
        return (jax.random.normal(k, shape, jnp.float32) / jnp.sqrt(fan_in)).astype(jnp.float32)

    return {
        "w_feat": lin(ks[0], frame_len, (frame_len, feature_dim)),
        "b_feat": jnp.zeros((1, feature_dim), jnp.float32),
        "w_att1": lin(ks[1], feature_dim, (feature_dim, hidden_dim)),
        "b_att1": jnp.zeros((1, hidden_dim), jnp.float32),
        "v_att":  lin(ks[2], hidden_dim, (hidden_dim, 1)),
        "b_v":    jnp.zeros((1, 1), jnp.float32),
        "w_fc1":  lin(ks[3], feature_dim, (feature_dim, hidden_dim)),
        "b_fc1":  jnp.zeros((1, hidden_dim), jnp.float32),
        "w_fc2":  lin(ks[4], hidden_dim, (hidden_dim, num_classes)),
        "b_fc2":  jnp.zeros((1, num_classes), jnp.float32),
    }


if __name__ == "__main__":
    key = jax.random.PRNGKey(0)
    k_param, k_wave = jax.random.split(key)

    # Small, lane-aligned stand-in shapes (real model: hop=320, D=768, H=256, C=8).
    B = 2
    hop = 128           # frame length / downsampling factor (stand-in for HuBERT's 320)
    T_out = 8           # padded to 16 inside the wrapper
    T_in = T_out * hop  # 1024
    feature_dim = 128   # stand-in for 768 (128-lane aligned)
    hidden_dim = 128    # stand-in for 256
    num_classes = 8     # padded to 128 lanes inside the wrapper

    params = init_params(k_param, frame_len=hop, feature_dim=feature_dim,
                         hidden_dim=hidden_dim, num_classes=num_classes)

    waveforms = jax.random.normal(k_wave, (B, 1, T_in), jnp.float32)
    lengths = jnp.array([T_in, T_in // 2], dtype=jnp.int32)

    # samples_per_step=1 -> grid=(2,): exercises batch tiling / pipelining.
    logits = emotion_model_forward(waveforms, lengths, params, hop=hop, samples_per_step=1)
    jax.block_until_ready(logits)
    assert logits.shape == (B, num_classes)
    assert jnp.all(jnp.isfinite(logits))
    print("KERNEL_OK")
</pallas_src>

<mosaic_0001>
module attributes {stable_mosaic.version = 11 : i64} {
  func.func @_emotion_kernel(%arg0: i32, %arg1: memref<1x16x128xf32, #tpu.memory_space<vmem>>, %arg2: memref<1x16x1xf32, #tpu.memory_space<vmem>>, %arg3: memref<128x128xbf16, #tpu.memory_space<vmem>>, %arg4: memref<1x128xf32, #tpu.memory_space<vmem>>, %arg5: memref<128x256xbf16, #tpu.memory_space<vmem>>, %arg6: memref<1x256xf32, #tpu.memory_space<vmem>>, %arg7: memref<1x128xf32, #tpu.memory_space<vmem>>, %arg8: memref<1x1xf32, #tpu.memory_space<vmem>>, %arg9: memref<128x128xbf16, #tpu.memory_space<vmem>>, %arg10: memref<1x128xf32, #tpu.memory_space<vmem>>, %arg11: memref<1x1x128xf32, #tpu.memory_space<vmem>>) attributes {dimension_semantics = [#tpu.dimension_semantics<parallel>], iteration_bounds = array<i64: 2>, scalar_prefetch = 0 : i64, scratch_operands = 0 : i64, tpu.core_type = #tpu.core_type<tc>, window_params = [{transform_indices = @transform_0, window_bounds = array<i64: 1, 16, 128>}, {transform_indices = @transform_1, window_bounds = array<i64: 1, 16, 1>}, {pipeline_mode = #tpu.pipeline_mode<synchronous>, transform_indices = @transform_2, window_bounds = array<i64: 128, 128>}, {pipeline_mode = #tpu.pipeline_mode<synchronous>, transform_indices = @transform_3, window_bounds = array<i64: 1, 128>}, {pipeline_mode = #tpu.pipeline_mode<synchronous>, transform_indices = @transform_4, window_bounds = array<i64: 128, 256>}, {pipeline_mode = #tpu.pipeline_mode<synchronous>, transform_indices = @transform_5, window_bounds = array<i64: 1, 256>}, {pipeline_mode = #tpu.pipeline_mode<synchronous>, transform_indices = @transform_6, window_bounds = array<i64: 1, 128>}, {pipeline_mode = #tpu.pipeline_mode<synchronous>, transform_indices = @transform_7, window_bounds = array<i64: 1, 1>}, {pipeline_mode = #tpu.pipeline_mode<synchronous>, transform_indices = @transform_8, window_bounds = array<i64: 128, 128>}, {pipeline_mode = #tpu.pipeline_mode<synchronous>, transform_indices = @transform_9, window_bounds = array<i64: 1, 128>}, {transform_indices = @transform_10, window_bounds = array<i64: 1, 1, 128>}]} {
    %c0 = arith.constant 0 : index
    %c0_0 = arith.constant 0 : index
    %c0_1 = arith.constant 0 : index
    %0 = vector.load %arg1[%c0, %c0_0, %c0_1] : memref<1x16x128xf32, #tpu.memory_space<vmem>>, vector<1x16x128xf32>
    %1 = vector.shape_cast %0 : vector<1x16x128xf32> to vector<16x128xf32>
    %2 = arith.truncf %1 : vector<16x128xf32> to vector<16x128xbf16>
    %c0_2 = arith.constant 0 : index
    %c0_3 = arith.constant 0 : index
    %3 = vector.load %arg3[%c0_2, %c0_3] : memref<128x128xbf16, #tpu.memory_space<vmem>>, vector<128x128xbf16>
    %cst = arith.constant dense<0.000000e+00> : vector<16x128xf32>
    %4 = tpu.matmul %2, %3, %cst {dimension_numbers = #tpu.dot_dimension_numbers<[1], [0], [0], [1], [0, 0, 1, 1], [], []>} : vector<16x128xbf16>, vector<128x128xbf16>, vector<16x128xf32> -> vector<16x128xf32>
    %c0_4 = arith.constant 0 : index
    %c0_5 = arith.constant 0 : index
    %5 = vector.load %arg4[%c0_4, %c0_5] : memref<1x128xf32, #tpu.memory_space<vmem>>, vector<1x128xf32>
    %6 = vector.broadcast %5 : vector<1x128xf32> to vector<16x128xf32>
    %7 = arith.addf %4, %6 : vector<16x128xf32>
    %8 = arith.truncf %7 : vector<16x128xf32> to vector<16x128xbf16>
    %c0_6 = arith.constant 0 : index
    %c0_7 = arith.constant 0 : index
    %9 = vector.load %arg5[%c0_6, %c0_7] : memref<128x256xbf16, #tpu.memory_space<vmem>>, vector<128x256xbf16>
    %cst_8 = arith.constant dense<0.000000e+00> : vector<16x256xf32>
    %10 = tpu.matmul %8, %9, %cst_8 {dimension_numbers = #tpu.dot_dimension_numbers<[1], [0], [0], [1], [0, 0, 1, 1], [], []>} : vector<16x128xbf16>, vector<128x256xbf16>, vector<16x256xf32> -> vector<16x256xf32>
    %c0_9 = arith.constant 0 : index
    %c0_10 = arith.constant 0 : index
    %11 = vector.load %arg6[%c0_9, %c0_10] : memref<1x256xf32, #tpu.memory_space<vmem>>, vector<1x256xf32>
    %12 = vector.broadcast %11 : vector<1x256xf32> to vector<16x256xf32>
    %13 = arith.addf %10, %12 : vector<16x256xf32>
    %14 = vector.shape_cast %13 : vector<16x256xf32> to vector<1x16x256xf32>
    %15 = vector.extract_strided_slice %14 {offsets = [0, 0, 0], sizes = [1, 16, 128], strides = [1, 1, 1]} : vector<1x16x256xf32> to vector<1x16x128xf32>
    %16 = math.tanh %15 : vector<1x16x128xf32>
    %17 = vector.extract_strided_slice %14 {offsets = [0, 0, 128], sizes = [1, 16, 128], strides = [1, 1, 1]} : vector<1x16x256xf32> to vector<1x16x128xf32>
    %c0_11 = arith.constant 0 : index
    %c0_12 = arith.constant 0 : index
    %18 = vector.load %arg7[%c0_11, %c0_12] : memref<1x128xf32, #tpu.memory_space<vmem>>, vector<1x128xf32>
    %19 = vector.shape_cast %18 : vector<1x128xf32> to vector<1x1x128xf32>
    %20 = vector.broadcast %19 : vector<1x1x128xf32> to vector<1x16x128xf32>
    %21 = arith.mulf %16, %20 : vector<1x16x128xf32>
    %cst_13 = arith.constant dense<0.000000e+00> : vector<1x16xf32>
    %22 = vector.multi_reduction <add>, %21, %cst_13 [2] : vector<1x16x128xf32> to vector<1x16xf32>
    %23 = vector.shape_cast %22 : vector<1x16xf32> to vector<1x16x1xf32>
    %c0_14 = arith.constant 0 : index
    %c0_15 = arith.constant 0 : index
    %24 = vector.load %arg8[%c0_14, %c0_15] : memref<1x1xf32, #tpu.memory_space<vmem>>, vector<1x1xf32>
    %25 = vector.shape_cast %24 : vector<1x1xf32> to vector<1x1x1xf32>
    %26 = vector.broadcast %25 : vector<1x1x1xf32> to vector<1x16x1xf32>
    %27 = arith.addf %23, %26 : vector<1x16x1xf32>
    %c0_16 = arith.constant 0 : index
    %c0_17 = arith.constant 0 : index
    %c0_18 = arith.constant 0 : index
    %28 = vector.load %arg2[%c0_16, %c0_17, %c0_18] : memref<1x16x1xf32, #tpu.memory_space<vmem>>, vector<1x16x1xf32>
    %cst_19 = arith.constant 0.000000e+00 : f32
    %29 = vector.broadcast %cst_19 : f32 to vector<1x16x1xf32>
    %30 = arith.cmpf ogt, %28, %29 : vector<1x16x1xf32>
    %cst_20 = arith.constant -1.000000e+30 : f32
    %31 = vector.broadcast %cst_20 : f32 to vector<1x16x1xf32>
    %32 = arith.select %30, %27, %31 : vector<1x16x1xi1>, vector<1x16x1xf32>
    %cst_21 = arith.constant dense<0xFF800000> : vector<1x1xf32>
    %33 = vector.multi_reduction <maximumf>, %32, %cst_21 [1] : vector<1x16x1xf32> to vector<1x1xf32>
    %34 = vector.shape_cast %33 : vector<1x1xf32> to vector<1x1x1xf32>
    %35 = vector.broadcast %34 : vector<1x1x1xf32> to vector<1x16x1xf32>
    %36 = arith.subf %32, %35 : vector<1x16x1xf32>
    %37 = math.exp %36 : vector<1x16x1xf32>
    %38 = arith.mulf %37, %28 : vector<1x16x1xf32>
    %cst_22 = arith.constant dense<0.000000e+00> : vector<1x1xf32>
    %39 = vector.multi_reduction <add>, %38, %cst_22 [1] : vector<1x16x1xf32> to vector<1x1xf32>
    %40 = vector.shape_cast %39 : vector<1x1xf32> to vector<1x1x1xf32>
    %cst_23 = arith.constant 9.99999968E-21 : f32
    %41 = vector.broadcast %cst_23 : f32 to vector<1x1x1xf32>
    %42 = arith.maximumf %40, %41 : vector<1x1x1xf32>
    %43 = tpu.reciprocal %42 {approx = true} : vector<1x1x1xf32> -> vector<1x1x1xf32>
    %44 = vector.broadcast %43 : vector<1x1x1xf32> to vector<1x16x1xf32>
    %45 = arith.mulf %38, %44 : vector<1x16x1xf32>
    %46 = vector.broadcast %45 : vector<1x16x1xf32> to vector<1x16x128xf32>
    %47 = arith.mulf %46, %17 : vector<1x16x128xf32>
    %cst_24 = arith.constant dense<0.000000e+00> : vector<1x128xf32>
    %48 = vector.multi_reduction <add>, %47, %cst_24 [1] : vector<1x16x128xf32> to vector<1x128xf32>
    %cst_25 = arith.constant 0.000000e+00 : f32
    %49 = vector.broadcast %cst_25 : f32 to vector<1x128xf32>
    %50 = arith.maximumf %48, %49 : vector<1x128xf32>
    %51 = arith.truncf %50 : vector<1x128xf32> to vector<1x128xbf16>
    %c0_26 = arith.constant 0 : index
    %c0_27 = arith.constant 0 : index
    %52 = vector.load %arg9[%c0_26, %c0_27] : memref<128x128xbf16, #tpu.memory_space<vmem>>, vector<128x128xbf16>
    %cst_28 = arith.constant dense<0.000000e+00> : vector<1x128xf32>
    %53 = tpu.matmul %51, %52, %cst_28 {dimension_numbers = #tpu.dot_dimension_numbers<[1], [0], [0], [1], [0, 0, 1, 1], [], []>} : vector<1x128xbf16>, vector<128x128xbf16>, vector<1x128xf32> -> vector<1x128xf32>
    %c0_29 = arith.constant 0 : index
    %c0_30 = arith.constant 0 : index
    %54 = vector.load %arg10[%c0_29, %c0_30] : memref<1x128xf32, #tpu.memory_space<vmem>>, vector<1x128xf32>
    %55 = arith.addf %53, %54 : vector<1x128xf32>
    %56 = vector.shape_cast %55 : vector<1x128xf32> to vector<1x1x128xf32>
    %c0_31 = arith.constant 0 : index
    %c0_32 = arith.constant 0 : index
    %c0_33 = arith.constant 0 : index
    %57 = vector.load %arg11[%c0_31, %c0_32, %c0_33] : memref<1x1x128xf32, #tpu.memory_space<vmem>>, vector<1x1x128xf32>
    tpu.vector_store %arg11[%c0_31, %c0_32, %c0_33], %56 {strides = array<i32>} : memref<1x1x128xf32, #tpu.memory_space<vmem>>, vector<1x1x128xf32>,
    return
  }
  func.func @transform_0(%arg0: i32) -> (i32, i32, i32) {
    %c0_i32 = arith.constant 0 : i32
    %c0_i32_0 = arith.constant 0 : i32
    %c0_i32_1 = arith.constant 0 : i32
    return %arg0, %c0_i32, %c0_i32_0 : i32, i32, i32
  }
  func.func @transform_1(%arg0: i32) -> (i32, i32, i32) {
    %c0_i32 = arith.constant 0 : i32
    %c0_i32_0 = arith.constant 0 : i32
    %c0_i32_1 = arith.constant 0 : i32
    return %arg0, %c0_i32, %c0_i32_0 : i32, i32, i32
  }
  func.func @transform_2(%arg0: i32) -> (i32, i32) {
    %c0_i32 = arith.constant 0 : i32
    %c0_i32_0 = arith.constant 0 : i32
    %c0_i32_1 = arith.constant 0 : i32
    return %c0_i32, %c0_i32_0 : i32, i32
  }
  func.func @transform_3(%arg0: i32) -> (i32, i32) {
    %c0_i32 = arith.constant 0 : i32
    %c0_i32_0 = arith.constant 0 : i32
    %c0_i32_1 = arith.constant 0 : i32
    return %c0_i32, %c0_i32_0 : i32, i32
  }
  func.func @transform_4(%arg0: i32) -> (i32, i32) {
    %c0_i32 = arith.constant 0 : i32
    %c0_i32_0 = arith.constant 0 : i32
    %c0_i32_1 = arith.constant 0 : i32
    return %c0_i32, %c0_i32_0 : i32, i32
  }
  func.func @transform_5(%arg0: i32) -> (i32, i32) {
    %c0_i32 = arith.constant 0 : i32
    %c0_i32_0 = arith.constant 0 : i32
    %c0_i32_1 = arith.constant 0 : i32
    return %c0_i32, %c0_i32_0 : i32, i32
  }
  func.func @transform_6(%arg0: i32) -> (i32, i32) {
    %c0_i32 = arith.constant 0 : i32
    %c0_i32_0 = arith.constant 0 : i32
    %c0_i32_1 = arith.constant 0 : i32
    return %c0_i32, %c0_i32_0 : i32, i32
  }
  func.func @transform_7(%arg0: i32) -> (i32, i32) {
    %c0_i32 = arith.constant 0 : i32
    %c0_i32_0 = arith.constant 0 : i32
    %c0_i32_1 = arith.constant 0 : i32
    return %c0_i32, %c0_i32_0 : i32, i32
  }
  func.func @transform_8(%arg0: i32) -> (i32, i32) {
    %c0_i32 = arith.constant 0 : i32
    %c0_i32_0 = arith.constant 0 : i32
    %c0_i32_1 = arith.constant 0 : i32
    return %c0_i32, %c0_i32_0 : i32, i32
  }
  func.func @transform_9(%arg0: i32) -> (i32, i32) {
    %c0_i32 = arith.constant 0 : i32
    %c0_i32_0 = arith.constant 0 : i32
    %c0_i32_1 = arith.constant 0 : i32
    return %c0_i32, %c0_i32_0 : i32, i32
  }
  func.func @transform_10(%arg0: i32) -> (i32, i32, i32) {
    %c0_i32 = arith.constant 0 : i32
    %c0_i32_0 = arith.constant 0 : i32
    %c0_i32_1 = arith.constant 0 : i32
    return %arg0, %c0_i32, %c0_i32_0 : i32, i32, i32
  }
}

</mosaic_0001>

<llo_original>
// kernel: tpu_custom_call.1
$region0: #{tpu_custom_call.1}
  #allocation0 [shape = 'u32[]', space=smem, size = 0x4, offset = 0x4, fixed_abs, tag = 'smem constant byte address 0x4 - core index']
  #allocation1 [shape = 'u32[144,128]{1,0:T(1,128)}', space=vmem, size = 0x12000, scoped, tag = 'internal scratch']
  #allocation2 [shape = 'f32[1,1]{1,0:T(1,128)S(1)}', space=vmem, size = 0x200, scoped, tag = 'scoped memory for tpu_custom_call.1']
  %s0 = inlined_call_operand.hbm [shape: f32[2,16,128], index: 0, kind: input, shape index: {}]
  %s1 = inlined_call_operand.vmem [shape: f32[2,16,1], index: 1, kind: input, shape index: {}]
  %s2 = inlined_call_operand.hbm [shape: bf16[128,128], index: 2, kind: input, shape index: {}]
  %s3 = inlined_call_operand.hbm [shape: f32[1,128], index: 3, kind: input, shape index: {}]
  %s4 = inlined_call_operand.hbm [shape: bf16[128,256], index: 4, kind: input, shape index: {}]
  %s5 = inlined_call_operand.hbm [shape: f32[1,256], index: 5, kind: input, shape index: {}]
  %s6 = inlined_call_operand.hbm [shape: f32[1,128], index: 6, kind: input, shape index: {}]
  %s7 = inlined_call_operand.<no memory space> [shape: f32[1,1], index: 7, kind: input, shape index: {}]
  %s8 = inlined_call_operand.vmem [shape: bf16[128,128], index: 8, kind: input, shape index: {}]
  %s9 = inlined_call_operand.vmem [shape: f32[1,128], index: 9, kind: input, shape index: {}]
  %s10 = inlined_call_operand.hbm [shape: f32[2,1,128], index: 10, kind: output, shape index: {}]
  %s11 = sld [smem:[#allocation0]]
  $region97: #{tpu_custom_call.1} parent=0
    _
  %s13 = ssub.s32 1, %s11
  %s14 = scalar_select 0, %s13, %s11
  %v15 = vstv %s7
  %16 = vst [vmem:[#allocation2] sm:$0x1] %v15
  $region1: #{tpu_custom_call.1} parent=0
    #allocation3 [shape = 'u8[16384]{0}', space=vmem, size = 0x4000, scoped, tag = 'input window, operand 0']
    #allocation4 [shape = 's32[2]{0}', space=sflag, size = 0x8, scoped, tag = 'scoped memory for tpu_custom_call.1']
    #allocation5 [shape = 's32[2]{0}', space=sflag, size = 0x8, scoped, tag = 'scoped memory for tpu_custom_call.1']
    #allocation6 [shape = 'u8[32768]{0}', space=vmem, size = 0x8000, scoped, tag = 'input window, operand 2, single buffered']
    #allocation7 [shape = 's32[1]{0}', space=sflag, size = 0x4, scoped, tag = 'scoped memory for tpu_custom_call.1']
    #allocation8 [shape = 'u8[512]{0}', space=vmem, size = 0x400, scoped, tag = 'input window, operand 3, single buffered']
    #allocation9 [shape = 'u8[65536]{0}', space=vmem, size = 0x10000, scoped, tag = 'input window, operand 4, single buffered']
    #allocation10 [shape = 's32[1]{0}', space=sflag, size = 0x4, scoped, tag = 'scoped memory for tpu_custom_call.1']
    #allocation11 [shape = 'u8[1024]{0}', space=vmem, size = 0x400, scoped, tag = 'input window, operand 5, single buffered']
    #allocation12 [shape = 'u8[512]{0}', space=vmem, size = 0x400, scoped, tag = 'input window, operand 6, single buffered']
    #allocation13 [shape = 's32[1]{0}', space=sflag, size = 0x4, scoped, tag = 'scoped memory for tpu_custom_call.1']
    #allocation14 [shape = 'u8[1024]{0}', space=vmem, size = 0x400, scoped, tag = 'output window, operand 0']
    %17 = vsyncpa [#allocation4], 0
    %s18 = scalar_lea.sflag [#allocation4], 1
    %19 = vsyncpa %s18, 0
    %20 = vsyncpa [#allocation7], 0
    %21 = vsyncpa [#allocation10], 0
    %22 = vsyncpa [#allocation13], 0
    %23 = vsyncpa [#allocation5], 0
    %s24 = scalar_lea.sflag [#allocation5], 1
    %25 = vsyncpa %s24, 0
    loop: start=0, step=1, limit=4
    $region2: #{tpu_custom_call.1} parent=1 // loop_pre_header
      _
    $region3: #{tpu_custom_call.1} parent=1 // loop_header
      %s27 = sphi 0, %s31
      %p28 = scmp.ge.s32.totalorder %s27, 4
      %s37 = sphi 0, %s39
      %s40 = sphi 0, %s37
      %s41 = sphi 0, %s40
      %s57 = sphi 0, %s41
      %s63 = sphi 0, %s65
      %s66 = sphi 0, %s63
      %s67 = sphi 0, %s66
      %s83 = sphi 0, %s67
      %s87 = sphi 0, %s87
      %s89 = sphi 0, %s87
      %s90 = sphi 0, %s89
      %s104 = sphi 0, %s90
      %s108 = sphi 0, %s108
      %s110 = sphi 0, %s108
      %s111 = sphi 0, %s110
      %s125 = sphi 0, %s111
      %s129 = sphi 0, %s129
      %s131 = sphi 0, %s129
      %s132 = sphi 0, %s131
      %s146 = sphi 0, %s132
      %s150 = sphi 0, %s150
      %s152 = sphi 0, %s150
      %s153 = sphi 0, %s152
      %s167 = sphi 0, %s153
      %s171 = sphi 0, %s171
      %s173 = sphi 0, %s171
      %s174 = sphi 0, %s173
      %s188 = sphi 0, %s174
      %s192 = sphi 0, %s192
      %s194 = sphi 0, %s192
      %s195 = sphi 0, %s194
      %s209 = sphi 0, %s195
      %s213 = sphi 0, %s213
      %s215 = sphi 0, %s213
      %s216 = sphi 0, %s215
      %s230 = sphi 0, %s216
      %s234 = sphi 0, %s234
      %s236 = sphi 0, %s234
      %s237 = sphi 0, %s236
      %s251 = sphi 0, %s237
      %s257 = sphi 0, %s259
      %s260 = sphi 0, %s257
      %s261 = sphi 0, %s260
      %s277 = sphi 0, %s261
    $region4: #{tpu_custom_call.1} parent=1 // loop_header_branch
      %30 = sbr.rel (%p28) target = $region8
    $region5: #{tpu_custom_call.1} parent=1 // loop_body
      %s32 = ssub.s32 %s27, 1
      %s33 = ssub.s32 %s27, 2
      %s34 = sadd.s32 %s27, 1
      %s35 = ssub.s32 %s27, %s34
      %p36 = scmp.eq.s32.totalorder %s35, 0
      %s38 = sadd.s32 %s37, 1
      %s39 = scalar_select %p36, %s37, %s38
      %p42 = pneg %p36
      %p43 = scmp.eq.s32.totalorder %s27, 1
      %p44 = por %p42, %p43
      %p45 = scmp.ne.s32.totalorder %s37, %s40
      %p46 = scmp.eq.s32.totalorder %s27, 0
      %p47 = por %p45, %p46
      %p48 = scmp.ne.s32.totalorder %s37, %s40
      %p49 = scmp.eq.s32.totalorder %s32, 1
      %p50 = por %p48, %p49
      %p51 = scmp.ne.s32.totalorder %s40, %s41
      %p52 = scmp.eq.s32.totalorder %s32, 0
      %p53 = por %p51, %p52
      %p54 = scmp.ne.s32.totalorder %s40, %s41
      %p55 = scmp.eq.s32.totalorder %s33, 1
      %p56 = por %p54, %p55
      %p58 = scmp.ne.s32.totalorder %s41, %s57
      %p59 = scmp.eq.s32.totalorder %s33, 0
      %p60 = por %p58, %p59
      %s61 = ssub.s32 %s27, %s34
      %p62 = scmp.eq.s32.totalorder %s61, 0
      %s64 = sadd.s32 %s63, 1
      %s65 = scalar_select %p62, %s63, %s64
      %p68 = pneg %p62
      %p69 = scmp.eq.s32.totalorder %s27, 1
      %p70 = por %p68, %p69
      %p71 = scmp.ne.s32.totalorder %s63, %s66
      %p72 = scmp.eq.s32.totalorder %s27, 0
      %p73 = por %p71, %p72
      %p74 = scmp.ne.s32.totalorder %s63, %s66
      %p75 = scmp.eq.s32.totalorder %s32, 1
      %p76 = por %p74, %p75
      %p77 = scmp.ne.s32.totalorder %s66, %s67
      %p78 = scmp.eq.s32.totalorder %s32, 0
      %p79 = por %p77, %p78
      %p80 = scmp.ne.s32.totalorder %s66, %s67
      %p81 = scmp.eq.s32.totalorder %s33, 1
      %p82 = por %p80, %p81
      %p84 = scmp.ne.s32.totalorder %s67, %s83
      %p85 = scmp.eq.s32.totalorder %s33, 0
      %p86 = por %p84, %p85
      %s88 = sadd.s32 %s87, 1
      %p91 = scmp.eq.s32.totalorder %s27, 1
      %p92 = scmp.ne.s32.totalorder %s87, %s89
      %p93 = scmp.eq.s32.totalorder %s27, 0
      %p94 = por %p92, %p93
      %p95 = scmp.ne.s32.totalorder %s87, %s89
      %p96 = scmp.eq.s32.totalorder %s32, 1
      %p97 = por %p95, %p96
      %p98 = scmp.ne.s32.totalorder %s89, %s90
      %p99 = scmp.eq.s32.totalorder %s32, 0
      %p100 = por %p98, %p99
      %p101 = scmp.ne.s32.totalorder %s89, %s90
      %p102 = scmp.eq.s32.totalorder %s33, 1
      %p103 = por %p101, %p102
      %p105 = scmp.ne.s32.totalorder %s90, %s104
      %p106 = scmp.eq.s32.totalorder %s33, 0
      %p107 = por %p105, %p106
      %s109 = sadd.s32 %s108, 1
      %p112 = scmp.eq.s32.totalorder %s27, 1
      %p113 = scmp.ne.s32.totalorder %s108, %s110
      %p114 = scmp.eq.s32.totalorder %s27, 0
      %p115 = por %p113, %p114
      %p116 = scmp.ne.s32.totalorder %s108, %s110
      %p117 = scmp.eq.s32.totalorder %s32, 1
      %p118 = por %p116, %p117
      %p119 = scmp.ne.s32.totalorder %s110, %s111
      %p120 = scmp.eq.s32.totalorder %s32, 0
      %p121 = por %p119, %p120
      %p122 = scmp.ne.s32.totalorder %s110, %s111
      %p123 = scmp.eq.s32.totalorder %s33, 1
      %p124 = por %p122, %p123
      %p126 = scmp.ne.s32.totalorder %s111, %s125
      %p127 = scmp.eq.s32.totalorder %s33, 0
      %p128 = por %p126, %p127
      %s130 = sadd.s32 %s129, 1
      %p133 = scmp.eq.s32.totalorder %s27, 1
      %p134 = scmp.ne.s32.totalorder %s129, %s131
      %p135 = scmp.eq.s32.totalorder %s27, 0
      %p136 = por %p134, %p135
      %p137 = scmp.ne.s32.totalorder %s129, %s131
      %p138 = scmp.eq.s32.totalorder %s32, 1
      %p139 = por %p137, %p138
      %p140 = scmp.ne.s32.totalorder %s131, %s132
      %p141 = scmp.eq.s32.totalorder %s32, 0
      %p142 = por %p140, %p141
      %p143 = scmp.ne.s32.totalorder %s131, %s132
      %p144 = scmp.eq.s32.totalorder %s33, 1
      %p145 = por %p143, %p144
      %p147 = scmp.ne.s32.totalorder %s132, %s146
      %p148 = scmp.eq.s32.totalorder %s33, 0
      %p149 = por %p147, %p148
      %s151 = sadd.s32 %s150, 1
      %p154 = scmp.eq.s32.totalorder %s27, 1
      %p155 = scmp.ne.s32.totalorder %s150, %s152
      %p156 = scmp.eq.s32.totalorder %s27, 0
      %p157 = por %p155, %p156
      %p158 = scmp.ne.s32.totalorder %s150, %s152
      %p159 = scmp.eq.s32.totalorder %s32, 1
      %p160 = por %p158, %p159
      %p161 = scmp.ne.s32.totalorder %s152, %s153
      %p162 = scmp.eq.s32.totalorder %s32, 0
      %p163 = por %p161, %p162
      %p164 = scmp.ne.s32.totalorder %s152, %s153
      %p165 = scmp.eq.s32.totalorder %s33, 1
      %p166 = por %p164, %p165
      %p168 = scmp.ne.s32.totalorder %s153, %s167
      %p169 = scmp.eq.s32.totalorder %s33, 0
      %p170 = por %p168, %p169
      %s172 = sadd.s32 %s171, 1
      %p175 = scmp.eq.s32.totalorder %s27, 1
      %p176 = scmp.ne.s32.totalorder %s171, %s173
      %p177 = scmp.eq.s32.totalorder %s27, 0
      %p178 = por %p176, %p177
      %p179 = scmp.ne.s32.totalorder %s171, %s173
      %p180 = scmp.eq.s32.totalorder %s32, 1
      %p181 = por %p179, %p180
      %p182 = scmp.ne.s32.totalorder %s173, %s174
      %p183 = scmp.eq.s32.totalorder %s32, 0
      %p184 = por %p182, %p183
      %p185 = scmp.ne.s32.totalorder %s173, %s174
      %p186 = scmp.eq.s32.totalorder %s33, 1
      %p187 = por %p185, %p186
      %p189 = scmp.ne.s32.totalorder %s174, %s188
      %p190 = scmp.eq.s32.totalorder %s33, 0
      %p191 = por %p189, %p190
      %s193 = sadd.s32 %s192, 1
      %p196 = scmp.eq.s32.totalorder %s27, 1
      %p197 = scmp.ne.s32.totalorder %s192, %s194
      %p198 = scmp.eq.s32.totalorder %s27, 0
      %p199 = por %p197, %p198
      %p200 = scmp.ne.s32.totalorder %s192, %s194
      %p201 = scmp.eq.s32.totalorder %s32, 1
      %p202 = por %p200, %p201
      %p203 = scmp.ne.s32.totalorder %s194, %s195
      %p204 = scmp.eq.s32.totalorder %s32, 0
      %p205 = por %p203, %p204
      %p206 = scmp.ne.s32.totalorder %s194, %s195
      %p207 = scmp.eq.s32.totalorder %s33, 1
      %p208 = por %p206, %p207
      %p210 = scmp.ne.s32.totalorder %s195, %s209
      %p211 = scmp.eq.s32.totalorder %s33, 0
      %p212 = por %p210, %p211
      %s214 = sadd.s32 %s213, 1
      %p217 = scmp.eq.s32.totalorder %s27, 1
      %p218 = scmp.ne.s32.totalorder %s213, %s215
      %p219 = scmp.eq.s32.totalorder %s27, 0
      %p220 = por %p218, %p219
      %p221 = scmp.ne.s32.totalorder %s213, %s215
      %p222 = scmp.eq.s32.totalorder %s32, 1
      %p223 = por %p221, %p222
      %p224 = scmp.ne.s32.totalorder %s215, %s216
      %p225 = scmp.eq.s32.totalorder %s32, 0
      %p226 = por %p224, %p225
      %p227 = scmp.ne.s32.totalorder %s215, %s216
      %p228 = scmp.eq.s32.totalorder %s33, 1
      %p229 = por %p227, %p228
      %p231 = scmp.ne.s32.totalorder %s216, %s230
      %p232 = scmp.eq.s32.totalorder %s33, 0
      %p233 = por %p231, %p232
      %s235 = sadd.s32 %s234, 1
      %p238 = scmp.eq.s32.totalorder %s27, 1
      %p239 = scmp.ne.s32.totalorder %s234, %s236
      %p240 = scmp.eq.s32.totalorder %s27, 0
      %p241 = por %p239, %p240
      %p242 = scmp.ne.s32.totalorder %s234, %s236
      %p243 = scmp.eq.s32.totalorder %s32, 1
      %p244 = por %p242, %p243
      %p245 = scmp.ne.s32.totalorder %s236, %s237
      %p246 = scmp.eq.s32.totalorder %s32, 0
      %p247 = por %p245, %p246
      %p248 = scmp.ne.s32.totalorder %s236, %s237
      %p249 = scmp.eq.s32.totalorder %s33, 1
      %p250 = por %p248, %p249
      %p252 = scmp.ne.s32.totalorder %s237, %s251
      %p253 = scmp.eq.s32.totalorder %s33, 0
      %p254 = por %p252, %p253
      %s255 = ssub.s32 %s27, %s34
      %p256 = scmp.eq.s32.totalorder %s255, 0
      %s258 = sadd.s32 %s257, 1
      %s259 = scalar_select %p256, %s257, %s258
      %p262 = pneg %p256
      %p263 = scmp.eq.s32.totalorder %s27, 1
      %p264 = por %p262, %p263
      %p265 = scmp.ne.s32.totalorder %s257, %s260
      %p266 = scmp.eq.s32.totalorder %s27, 0
      %p267 = por %p265, %p266
      %p268 = scmp.ne.s32.totalorder %s257, %s260
      %p269 = scmp.eq.s32.totalorder %s32, 1
      %p270 = por %p268, %p269
      %p271 = scmp.ne.s32.totalorder %s260, %s261
      %p272 = scmp.eq.s32.totalorder %s32, 0
      %p273 = por %p271, %p272
      %p274 = scmp.ne.s32.totalorder %s260, %s261
      %p275 = scmp.eq.s32.totalorder %s33, 1
      %p276 = por %p274, %p275
      %p278 = scmp.ne.s32.totalorder %s261, %s277
      %p279 = scmp.eq.s32.totalorder %s33, 0
      %p280 = por %p278, %p279
      %p281 = scmp.le.s32.totalorder 1, %s27
      %p282 = scmp.lt.s32.totalorder %s27, 3
      %p283 = pnand %p281, %p282
      %p284 = pneg %p283
      // Predicated region
      $region9: #{tpu_custom_call.1} parent=5 // pred_check
        _
      $region10: #{tpu_custom_call.1} parent=5 // pred_check_branch
        %286 = sbr.rel (%p283) target = $region12
      $region11: #{tpu_custom_call.1} parent=5 // pred_region
        %s287 = ssub.s32 %s27, 1
        // Predicated region
        $region13: #{tpu_custom_call.1} parent=11 // pred_check
          %p288 = pneg %p100
        $region14: #{tpu_custom_call.1} parent=11 // pred_check_branch
          %290 = sbr.rel (%p288) target = $region16
        $region15: #{tpu_custom_call.1} parent=11 // pred_region
          %s292 = ssub.s32 1024, 1024
          %293 = vsyncadd [#allocation7], %s292
          %s294 = sshll.u32 [#allocation6], 4
          %s295 = int_to_ptr.vmem [resolvable:$true] %s294
          %300 = dma.hbm_to_vmem [thread:$0]  %s2, 1024, %s295, [#allocation7], 64, 64, 4
        $region16: #{tpu_custom_call.1} parent=11 // pred_fallthru
          _
        // Predicated region
        $region17: #{tpu_custom_call.1} parent=11 // pred_check
          %p301 = pneg %p121
        $region18: #{tpu_custom_call.1} parent=11 // pred_check_branch
          %303 = sbr.rel (%p301) target = $region20
        $region19: #{tpu_custom_call.1} parent=11 // pred_region
          %s305 = ssub.s32 16, 16
          %306 = vsyncadd [#allocation7], %s305
          %s308 = sshll.u32 [#allocation8], 4
          %s309 = int_to_ptr.vmem [resolvable:$true] %s308
          %311 = dma.hbm_to_vmem [thread:$0]  %s3, 16, %s309, [#allocation7]
        $region20: #{tpu_custom_call.1} parent=11 // pred_fallthru
          _
        // Predicated region
        $region21: #{tpu_custom_call.1} parent=11 // pred_check
          %p312 = pneg %p142
        $region22: #{tpu_custom_call.1} parent=11 // pred_check_branch
          %314 = sbr.rel (%p312) target = $region24
        $region23: #{tpu_custom_call.1} parent=11 // pred_region
          %s316 = ssub.s32 2048, 2048
          %317 = vsyncadd [#allocation10], %s316
          %s318 = sshll.u32 [#allocation9], 4
          %s319 = int_to_ptr.vmem [resolvable:$true] %s318
          %324 = dma.hbm_to_vmem [thread:$0]  %s4, 2048, %s319, [#allocation10], 128, 128, 8
        $region24: #{tpu_custom_call.1} parent=11 // pred_fallthru
          _
        // Predicated region
        $region25: #{tpu_custom_call.1} parent=11 // pred_check
          %p325 = pneg %p163
        $region26: #{tpu_custom_call.1} parent=11 // pred_check_branch
          %327 = sbr.rel (%p325) target = $region28
        $region27: #{tpu_custom_call.1} parent=11 // pred_region
          %s329 = ssub.s32 32, 32
          %330 = vsyncadd [#allocation10], %s329
          %s332 = sshll.u32 [#allocation11], 4
          %s333 = int_to_ptr.vmem [resolvable:$true] %s332
          %335 = dma.hbm_to_vmem [thread:$0]  %s5, 32, %s333, [#allocation10]
        $region28: #{tpu_custom_call.1} parent=11 // pred_fallthru
          _
        // Predicated region
        $region29: #{tpu_custom_call.1} parent=11 // pred_check
          %p336 = pneg %p184
        $region30: #{tpu_custom_call.1} parent=11 // pred_check_branch
          %338 = sbr.rel (%p336) target = $region32
        $region31: #{tpu_custom_call.1} parent=11 // pred_region
          %s340 = ssub.s32 16, 16
          %341 = vsyncadd [#allocation13], %s340
          %s343 = sshll.u32 [#allocation12], 4
          %s344 = int_to_ptr.vmem [resolvable:$true] %s343
          %346 = dma.hbm_to_vmem [thread:$0]  %s6, 16, %s344, [#allocation13]
        $region32: #{tpu_custom_call.1} parent=11 // pred_fallthru
          _
        // Predicated region
        $region33: #{tpu_custom_call.1} parent=11 // pred_check
          %p347 = pneg %p205
        $region34: #{tpu_custom_call.1} parent=11 // pred_check_branch
          %349 = sbr.rel (%p347) target = $region36
        $region35: #{tpu_custom_call.1} parent=11 // pred_region
          _
        $region36: #{tpu_custom_call.1} parent=11 // pred_fallthru
          _
        // Predicated region
        $region37: #{tpu_custom_call.1} parent=11 // pred_check
          %p350 = pneg %p226
        $region38: #{tpu_custom_call.1} parent=11 // pred_check_branch
          %352 = sbr.rel (%p350) target = $region40
        $region39: #{tpu_custom_call.1} parent=11 // pred_region
          _
        $region40: #{tpu_custom_call.1} parent=11 // pred_fallthru
          _
        // Predicated region
        $region41: #{tpu_custom_call.1} parent=11 // pred_check
          %p353 = pneg %p247
        $region42: #{tpu_custom_call.1} parent=11 // pred_check_branch
          %355 = sbr.rel (%p353) target = $region44
        $region43: #{tpu_custom_call.1} parent=11 // pred_region
          _
        $region44: #{tpu_custom_call.1} parent=11 // pred_fallthru
          _
      $region12: #{tpu_custom_call.1} parent=5 // pred_fallthru
        _
      %p356 = scmp.lt.s32.totalorder %s27, 2
      // Predicated region
      $region45: #{tpu_custom_call.1} parent=5 // pred_check
        %p357 = pneg %p356
      $region46: #{tpu_custom_call.1} parent=5 // pred_check_branch
        %359 = sbr.rel (%p357) target = $region48
      $region47: #{tpu_custom_call.1} parent=5 // pred_region
        // Predicated region
        $region49: #{tpu_custom_call.1} parent=47 // pred_check
          %p360 = pneg %p47
        $region50: #{tpu_custom_call.1} parent=47 // pred_check_branch
          %362 = sbr.rel (%p360) target = $region52
        $region51: #{tpu_custom_call.1} parent=47 // pred_region
          %s363 = sand.u32 %s37, 1
          %s364 = scalar_lea.sflag [#allocation4], %s363
          %s365 = sand.u32 %s37, 1
          %s366 = smul.addr %s365, 16
          %s367 = scalar_lea.vmem [#allocation3], %s366
          %s369 = ssub.s32 256, 256
          %370 = vsyncadd %s364, %s369
          %s371 = smul.addr %s27, 2
          %s372 = smul.addr %s371, 128
          %s373 = scalar_lea.hbm %s0, %s372
          %s374 = sshll.u32 %s367, 4
          %s375 = int_to_ptr.vmem [resolvable:$true] %s374
          %380 = dma.hbm_to_vmem [thread:$0]  %s373, 256, %s375, %s364, 128, 128, 8
        $region52: #{tpu_custom_call.1} parent=47 // pred_fallthru
          _
        // Predicated region
        $region53: #{tpu_custom_call.1} parent=47 // pred_check
          %p381 = pneg %p73
        $region54: #{tpu_custom_call.1} parent=47 // pred_check_branch
          %383 = sbr.rel (%p381) target = $region56
        $region55: #{tpu_custom_call.1} parent=47 // pred_region
          %p384 = scmp.lt.s32.totalorder %s27, 1
          %s385 = scalar_select %p384, %s27, 1
          %s386 = smul.addr %s385, 2
          %s387 = smul.addr %s386, 8
          %s388 = scalar_lea.vmem %s1, %s387
        $region56: #{tpu_custom_call.1} parent=47 // pred_fallthru
          _
      $region48: #{tpu_custom_call.1} parent=5 // pred_fallthru
        _
      %p389 = scmp.le.s32.totalorder 1, %s27
      %p390 = scmp.lt.s32.totalorder %s27, 3
      %p391 = pnand %p389, %p390
      %p392 = pneg %p391
      // Predicated region
      $region57: #{tpu_custom_call.1} parent=5 // pred_check
        _
      $region58: #{tpu_custom_call.1} parent=5 // pred_check_branch
        %394 = sbr.rel (%p391) target = $region60
      $region59: #{tpu_custom_call.1} parent=5 // pred_region
        %s395 = ssub.s32 %s27, 1
        %s396 = sand.u32 %s40, 1
        %s397 = scalar_lea.sflag [#allocation4], %s396
        %s398 = sand.u32 %s40, 1
        %s399 = smul.addr %s398, 16
        %s400 = scalar_lea.vmem [#allocation3], %s399
        // Predicated region
        $region61: #{tpu_custom_call.1} parent=59 // pred_check
          %p401 = pneg %p53
        $region62: #{tpu_custom_call.1} parent=59 // pred_check_branch
          %403 = sbr.rel (%p401) target = $region64
        $region63: #{tpu_custom_call.1} parent=59 // pred_region
          %404 = dma.done %s397, 256
        $region64: #{tpu_custom_call.1} parent=59 // pred_fallthru
          _
        // Predicated region
        $region65: #{tpu_custom_call.1} parent=59 // pred_check
          %p405 = pneg %p100
        $region66: #{tpu_custom_call.1} parent=59 // pred_check_branch
          %407 = sbr.rel (%p405) target = $region68
        $region67: #{tpu_custom_call.1} parent=59 // pred_region
          %408 = dma.done [#allocation7], 1024
        $region68: #{tpu_custom_call.1} parent=59 // pred_fallthru
          _
        // Predicated region
        $region69: #{tpu_custom_call.1} parent=59 // pred_check
          %p409 = pneg %p121
        $region70: #{tpu_custom_call.1} parent=59 // pred_check_branch
          %411 = sbr.rel (%p409) target = $region72
        $region71: #{tpu_custom_call.1} parent=59 // pred_region
          %412 = dma.done [#allocation7], 16
        $region72: #{tpu_custom_call.1} parent=59 // pred_fallthru
          _
        // Predicated region
        $region73: #{tpu_custom_call.1} parent=59 // pred_check
          %p413 = pneg %p142
        $region74: #{tpu_custom_call.1} parent=59 // pred_check_branch
          %415 = sbr.rel (%p413) target = $region76
        $region75: #{tpu_custom_call.1} parent=59 // pred_region
          %416 = dma.done [#allocation10], 2048
        $region76: #{tpu_custom_call.1} parent=59 // pred_fallthru
          _
        // Predicated region
        $region77: #{tpu_custom_call.1} parent=59 // pred_check
          %p417 = pneg %p163
        $region78: #{tpu_custom_call.1} parent=59 // pred_check_branch
          %419 = sbr.rel (%p417) target = $region80
        $region79: #{tpu_custom_call.1} parent=59 // pred_region
          %420 = dma.done [#allocation10], 32
        $region80: #{tpu_custom_call.1} parent=59 // pred_fallthru
          _
        // Predicated region
        $region81: #{tpu_custom_call.1} parent=59 // pred_check
          %p421 = pneg %p184
        $region82: #{tpu_custom_call.1} parent=59 // pred_check_branch
          %423 = sbr.rel (%p421) target = $region84
        $region83: #{tpu_custom_call.1} parent=59 // pred_region
          %424 = dma.done [#allocation13], 16
        $region84: #{tpu_custom_call.1} parent=59 // pred_fallthru
          _
        %s425 = sand.u32 %s40, 1
        %s426 = scalar_lea.sflag [#allocation4], %s425
        %s427 = sand.u32 %s40, 1
        %s428 = smul.addr %s427, 16
        %s429 = scalar_lea.vmem [#allocation3], %s428
        %p430 = pneg %p53
        %p431 = pneg %p50
        %p432 = scmp.lt.s32.totalorder %s32, 1
        %s433 = scalar_select %p432, %s32, 1
        %s434 = smul.addr %s433, 2
        %s435 = smul.addr %s434, 8
        %s436 = scalar_lea.vmem %s1, %s435
        %p437 = pneg %p79
        %p438 = pneg %p76
        %p439 = pneg %p100
        %p440 = pneg %p97
        %p441 = pneg %p121
        %p442 = pneg %p118
        %p443 = pneg %p142
        %p444 = pneg %p139
        %p445 = pneg %p163
        %p446 = pneg %p160
        %p447 = pneg %p184
        %p448 = pneg %p181
        %p449 = pneg %p205
        %p450 = pneg %p202
        %p451 = pneg %p226
        %p452 = pneg %p223
        %p453 = pneg %p247
        %p454 = pneg %p244
        %p455 = pneg %p273
        %p456 = pneg %p270
        %s457 = sand.u32 %s260, 1
        %s458 = scalar_lea.sflag [#allocation5], %s457
        %s459 = sand.u32 %s260, 1
        %s460 = scalar_lea.vmem [#allocation14], %s459
        %p461 = scmp.lt.s32.totalorder %s32, 1
        %s462 = scalar_select %p461, %s32, 1
        %s463 = smul.addr %s462, 2
        %s464 = smul.addr %s463, 8
        %s465 = scalar_lea.vmem %s1, %s464
        %v467 = vld [vmem:[%s400] sm:$0xff]
        %v468 = vld [vmem:[%s400 + $0x8] sm:$0xff]
        %v469 = vpack.c.bf16 %v468, %v467
        %v470 = vld [vmem:[#allocation6] sm:$0xf]
        %v471 = vld [vmem:[#allocation6 + $0x4] sm:$0xf]
        %v472 = vld [vmem:[#allocation6 + $0x8] sm:$0xf]
        %v473 = vld [vmem:[#allocation6 + $0xc] sm:$0xf]
        %v474 = vld [vmem:[#allocation6 + $0x10] sm:$0xf]
        %v475 = vld [vmem:[#allocation6 + $0x14] sm:$0xf]
        %v476 = vld [vmem:[#allocation6 + $0x18] sm:$0xf]
        %v477 = vld [vmem:[#allocation6 + $0x1c] sm:$0xf]
        %v478 = vld [vmem:[#allocation6 + $0x20] sm:$0xf]
        %v479 = vld [vmem:[#allocation6 + $0x24] sm:$0xf]
        %v480 = vld [vmem:[#allocation6 + $0x28] sm:$0xf]
        %v481 = vld [vmem:[#allocation6 + $0x2c] sm:$0xf]
        %v482 = vld [vmem:[#allocation6 + $0x30] sm:$0xf]
        %v483 = vld [vmem:[#allocation6 + $0x34] sm:$0xf]
        %v484 = vld [vmem:[#allocation6 + $0x38] sm:$0xf]
        %v485 = vld [vmem:[#allocation6 + $0x3c] sm:$0xf]
        %v486 = vld [vmem:[#allocation8] sm:$0x1]
        %v488 = vlaneseq
        %v489 = vshrl.u32 %v488, 7
        %v490 = vsub.s32 0, %v489
        %v491 = vrot.slane %v486, %v490
        %v509 = vunpack.c.l.b16 %v470
        %v510 = vunpack.c.l.b16 %v471
        %v511 = vunpack.c.l.b16 %v472
        %v512 = vunpack.c.l.b16 %v473
        %v513 = vunpack.c.l.b16 %v474
        %v514 = vunpack.c.l.b16 %v475
        %v515 = vunpack.c.l.b16 %v476
        %v516 = vunpack.c.l.b16 %v477
        %v517 = vunpack.c.l.b16 %v478
        %v518 = vunpack.c.l.b16 %v479
        %v519 = vunpack.c.l.b16 %v480
        %v520 = vunpack.c.l.b16 %v481
        %v521 = vunpack.c.l.b16 %v482
        %v522 = vunpack.c.l.b16 %v483
        %v523 = vunpack.c.l.b16 %v484
        %v524 = vunpack.c.l.b16 %v485
        %v525 = vpack.c.b16 %v510, %v509
        %v526 = vpack.c.b16 %v512, %v511
        %v527 = vpack.c.b16 %v514, %v513
        %v528 = vpack.c.b16 %v516, %v515
        %v529 = vpack.c.b16 %v518, %v517
        %v530 = vpack.c.b16 %v520, %v519
        %v531 = vpack.c.b16 %v522, %v521
        %v532 = vpack.c.b16 %v524, %v523
        %541 = vmatprep.subr.bf16.mxu0 0
        %542 = vmatpush1.bf16.msra.mxu0 %v525
        %543 = vmatprep.subr.bf16.mxu0 0
        %544 = vmatpush1.bf16.msra.mxu0 %v526
        %545 = vmatprep.subr.bf16.mxu0 0
        %546 = vmatpush1.bf16.msra.mxu0 %v527
        %547 = vmatprep.subr.bf16.mxu0 0
        %548 = vmatpush1.bf16.msra.mxu0 %v528
        %549 = vmatprep.subr.bf16.mxu0 0
        %550 = vmatpush1.bf16.msra.mxu0 %v529
        %551 = vmatprep.subr.bf16.mxu0 0
        %552 = vmatpush1.bf16.msra.mxu0 %v530
        %553 = vmatprep.subr.bf16.mxu0 0
        %554 = vmatpush1.bf16.msra.mxu0 %v531
        %555 = vmatprep.subr.bf16.mxu0 0
        %556 = vmatpush1.bf16.msra.mxu0 %v532
        %557 = vmatprep.subr.bf16.mxu0 0
        %558 = vmatpush1.bf16.msra.mxu0 0
        %559 = vmatprep.subr.bf16.mxu0 0
        %560 = vmatpush1.bf16.msra.mxu0 0
        %561 = vmatprep.subr.bf16.mxu0 0
        %562 = vmatpush1.bf16.msra.mxu0 0
        %563 = vmatprep.subr.bf16.mxu0 0
        %564 = vmatpush1.bf16.msra.mxu0 0
        %565 = vmatprep.subr.bf16.mxu0 0
        %566 = vmatpush1.bf16.msra.mxu0 0
        %567 = vmatprep.subr.bf16.mxu0 0
        %568 = vmatpush1.bf16.msra.mxu0 0
        %569 = vmatprep.subr.bf16.mxu0 0
        %570 = vmatpush1.bf16.msra.mxu0 0
        %571 = vmatprep.subr.bf16.mxu0 0
        %572 = vmatpush1.bf16.msra.mxu0 0
        %573 = vmatprep.mubr.bf16.mxu0 0
        %574 = vmatmul.mubr.bf16.gmra.mrb[0].mxu0 %v469
        %v575 = vpop.f32.mrb[0].mxu0
        %v576 = vadd.f32 %v491, %v575
        %v577 = vpop.f32.mrb[0].mxu0
        %v578 = vpop.f32.mrb[0].mxu0
        %v579 = vadd.f32 %v491, %v578
        %v580 = vpop.f32.mrb[0].mxu0
        %581 = vdwg.mxu0
        %v582 = vpack.c.bf16 %v579, %v576
        %v583 = vld [vmem:[#allocation9] sm:$0xff]
        %v584 = vld [vmem:[#allocation9 + $0x8] sm:$0xff]
        %v585 = vld [vmem:[#allocation9 + $0x10] sm:$0xff]
        %v586 = vld [vmem:[#allocation9 + $0x18] sm:$0xff]
        %v587 = vld [vmem:[#allocation9 + $0x20] sm:$0xff]
        %v588 = vld [vmem:[#allocation9 + $0x28] sm:$0xff]
        %v589 = vld [vmem:[#allocation9 + $0x30] sm:$0xff]
        %v590 = vld [vmem:[#allocation9 + $0x38] sm:$0xff]
        %v591 = vld [vmem:[#allocation9 + $0x40] sm:$0xff]
        %v592 = vld [vmem:[#allocation9 + $0x48] sm:$0xff]
        %v593 = vld [vmem:[#allocation9 + $0x50] sm:$0xff]
        %v594 = vld [vmem:[#allocation9 + $0x58] sm:$0xff]
        %v595 = vld [vmem:[#allocation9 + $0x60] sm:$0xff]
        %v596 = vld [vmem:[#allocation9 + $0x68] sm:$0xff]
        %v597 = vld [vmem:[#allocation9 + $0x70] sm:$0xff]
        %v598 = vld [vmem:[#allocation9 + $0x78] sm:$0xff]
        %v599 = vld [vmem:[#allocation11] sm:$0x3]
        %v601 = vlaneseq
        %v602 = vshrl.u32 %v601, 7
        %v603 = vsub.s32 0, %v602
        %v604 = vrot.slane %v599, %v603
        %v605 = vlaneseq
        %v606 = vshrl.u32 %v605, 7
        %v607 = vsub.s32 1, %v606
        %v608 = vrot.slane %v599, %v607
        %v627 = vunpack.c.l.b16 %v583
        %v628 = vunpack.c.h.b16 %v583
        %v629 = vunpack.c.l.b16 %v584
        %v630 = vunpack.c.h.b16 %v584
        %v631 = vunpack.c.l.b16 %v585
        %v632 = vunpack.c.h.b16 %v585
        %v633 = vunpack.c.l.b16 %v586
        %v634 = vunpack.c.h.b16 %v586
        %v635 = vunpack.c.l.b16 %v587
        %v636 = vunpack.c.h.b16 %v587
        %v637 = vunpack.c.l.b16 %v588
        %v638 = vunpack.c.h.b16 %v588
        %v639 = vunpack.c.l.b16 %v589
        %v640 = vunpack.c.h.b16 %v589
        %v641 = vunpack.c.l.b16 %v590
        %v642 = vunpack.c.h.b16 %v590
        %v643 = vunpack.c.l.b16 %v591
        %v644 = vunpack.c.h.b16 %v591
        %v645 = vunpack.c.l.b16 %v592
        %v646 = vunpack.c.h.b16 %v592
        %v647 = vunpack.c.l.b16 %v593
        %v648 = vunpack.c.h.b16 %v593
        %v649 = vunpack.c.l.b16 %v594
        %v650 = vunpack.c.h.b16 %v594
        %v651 = vunpack.c.l.b16 %v595
        %v652 = vunpack.c.h.b16 %v595
        %v653 = vunpack.c.l.b16 %v596
        %v654 = vunpack.c.h.b16 %v596
        %v655 = vunpack.c.l.b16 %v597
        %v656 = vunpack.c.h.b16 %v597
        %v657 = vunpack.c.l.b16 %v598
        %v658 = vunpack.c.h.b16 %v598
        %v659 = vpack.c.b16 %v629, %v627
        %v660 = vpack.c.b16 %v630, %v628
        %v661 = vpack.c.b16 %v633, %v631
        %v662 = vpack.c.b16 %v634, %v632
        %v663 = vpack.c.b16 %v637, %v635
        %v664 = vpack.c.b16 %v638, %v636
        %v665 = vpack.c.b16 %v641, %v639
        %v666 = vpack.c.b16 %v642, %v640
        %v667 = vpack.c.b16 %v645, %v643
        %v668 = vpack.c.b16 %v646, %v644
        %v669 = vpack.c.b16 %v649, %v647
        %v670 = vpack.c.b16 %v650, %v648
        %v671 = vpack.c.b16 %v653, %v651
        %v672 = vpack.c.b16 %v654, %v652
        %v673 = vpack.c.b16 %v657, %v655
        %v674 = vpack.c.b16 %v658, %v656
        %691 = vmatprep.subr.bf16.mxu0 %v660
        %692 = vmatpush1.bf16.msra.mxu0 %v659
        %693 = vmatprep.subr.bf16.mxu0 %v662
        %694 = vmatpush1.bf16.msra.mxu0 %v661
        %695 = vmatprep.subr.bf16.mxu0 %v664
        %696 = vmatpush1.bf16.msra.mxu0 %v663
        %697 = vmatprep.subr.bf16.mxu0 %v666
        %698 = vmatpush1.bf16.msra.mxu0 %v665
        %699 = vmatprep.subr.bf16.mxu0 %v668
        %700 = vmatpush1.bf16.msra.mxu0 %v667
        %701 = vmatprep.subr.bf16.mxu0 %v670
        %702 = vmatpush1.bf16.msra.mxu0 %v669
        %703 = vmatprep.subr.bf16.mxu0 %v672
        %704 = vmatpush1.bf16.msra.mxu0 %v671
        %705 = vmatprep.subr.bf16.mxu0 %v674
        %706 = vmatpush1.bf16.msra.mxu0 %v673
        %707 = vmatprep.subr.bf16.mxu0 0
        %708 = vmatpush1.bf16.msra.mxu0 0
        %709 = vmatprep.subr.bf16.mxu0 0
        %710 = vmatpush1.bf16.msra.mxu0 0
        %711 = vmatprep.subr.bf16.mxu0 0
        %712 = vmatpush1.bf16.msra.mxu0 0
        %713 = vmatprep.subr.bf16.mxu0 0
        %714 = vmatpush1.bf16.msra.mxu0 0
        %715 = vmatprep.subr.bf16.mxu0 0
        %716 = vmatpush1.bf16.msra.mxu0 0
        %717 = vmatprep.subr.bf16.mxu0 0
        %718 = vmatpush1.bf16.msra.mxu0 0
        %719 = vmatprep.subr.bf16.mxu0 0
        %720 = vmatpush1.bf16.msra.mxu0 0
        %721 = vmatprep.subr.bf16.mxu0 0
        %722 = vmatpush1.bf16.msra.mxu0 0
        %723 = vmatprep.mubr.bf16.mxu0 0
        %724 = vmatmul.mubr.bf16.gmra.mrb[0].mxu0 %v582
        %v725 = vpop.f32.mrb[0].mxu0
        %v726 = vadd.f32 %v604, %v725
        %v727 = vpop.f32.mrb[0].mxu0
        %v728 = vadd.f32 %v608, %v727
        %v729 = vpop.f32.mrb[0].mxu0
        %v730 = vadd.f32 %v604, %v729
        %v731 = vpop.f32.mrb[0].mxu0
        %v732 = vadd.f32 %v608, %v731
        %733 = vdwg.mxu0
        %v734 = vtanh.pop %v726
        %v735 = vtanh.pop %v730
        %v736 = vld [vmem:[#allocation12] sm:$0x1]
        %v738 = vlaneseq
        %v739 = vshrl.u32 %v738, 7
        %v740 = vsub.s32 0, %v739
        %v741 = vrot.slane %v736, %v740
        %v743 = vmul.f32 %v734, %v741
        %v744 = vmul.f32 %v735, %v741
        %745 = vadd.xlane.f32.xlu0 %v743
        %v746 = vpop.xlane.xlu0 %745
        %747 = vadd.xlane.f32.xlu0 %v744
        %v748 = vpop.xlane.xlu0 %747
        %v749 = vld [vmem:[#allocation2] sm:$0x1]
        %v751 = vlaneseq
        %v752 = vshrl.u32 %v751, 7
        %v753 = vsub.s32 0, %v752
        %v754 = vrot.slane %v749, %v753
        %v756 = vadd.f32 %v746, %v754
        %v757 = vadd.f32 %v748, %v754
        %v758 = vld [vmem:[%s465] sm:$0xff]
        %v759 = vld [vmem:[%s465 + $0x8] sm:$0xff]
        %vm760 = vcmp.gt.f32.partialorder %v758, 0.0
        %vm761 = vcmp.gt.f32.partialorder %v759, 0.0
        %v762 = vsel %vm760, %v756, -1e+30
        %v763 = vsel %vm761, %v757, -1e+30
        %vm764 = vcmask 7168
        %v765 = vsel %vm764, %v762, -inf
        %v766 = vsel %vm764, %v763, -inf
        %v767 = vmax.f32 %v765, %v766
        %v768 = vrot.slane %v767, 4
        %v769 = vmax.f32 %v767, %v768
        %v770 = vrot.slane %v769, 2
        %v771 = vmax.f32 %v769, %v770
        %v772 = vrot.slane %v771, 1
        %v773 = vmax.f32 %v771, %v772
        %v774 = vsub.f32 %v762, %v773
        %v775 = vsub.f32 %v763, %v773
        %v776 = vmul.f32 %v774, 1.442695
        %v777 = vpow.pop %v776
        %v778 = vmul.f32 %v775, 1.442695
        %v779 = vpow.pop %v778
        %v780 = vmul.f32 %v777, %v758
        %v781 = vmul.f32 %v779, %v759
        %v782 = vsel %vm764, %v780, 0.0
        %v783 = vsel %vm764, %v781, 0.0
        %v784 = vadd.f32 %v782, %v783
        %v785 = vrot.slane %v784, 4
        %v786 = vadd.f32 %v784, %v785
        %v787 = vrot.slane %v786, 2
        %v788 = vadd.f32 %v786, %v787
        %v789 = vrot.slane %v788, 1
        %v790 = vadd.f32 %v788, %v789
        %v791 = vmax.f32 %v790, 1e-20
        %v792 = vrcp.pop %v791
        %v793 = vmul.f32 %v780, %v792
        %v794 = vmul.f32 %v781, %v792
        %796 = vset.pattern.permute.xlu0 0
        %797 = vperm.xlu0 %796, %v793
        %v798 = vpop.permute.xlu0 %797
        %801 = vset.pattern.permute.xlu0 0
        %802 = vperm.xlu0 %801, %v794
        %v803 = vpop.permute.xlu0 %802
        %v805 = vmul.f32 %v798, %v728
        %v806 = vmul.f32 %v803, %v732
        %v807 = vadd.f32 %v805, %v806
        %v808 = vrot.slane %v807, 4
        %v809 = vadd.f32 %v807, %v808
        %v810 = vrot.slane %v809, 2
        %v811 = vadd.f32 %v809, %v810
        %v812 = vrot.slane %v811, 1
        %v813 = vadd.f32 %v811, %v812
        %v814 = vmax.f32 %v813, 0.0
        %v815 = vpack.c.bf16 %v814, %v814
        %v816 = vld [vmem:[%s8] sm:$0xf]
        %v817 = vld [vmem:[%s8 + $0x4] sm:$0xf]
        %v818 = vld [vmem:[%s8 + $0x8] sm:$0xf]
        %v819 = vld [vmem:[%s8 + $0xc] sm:$0xf]
        %v820 = vld [vmem:[%s8 + $0x10] sm:$0xf]
        %v821 = vld [vmem:[%s8 + $0x14] sm:$0xf]
        %v822 = vld [vmem:[%s8 + $0x18] sm:$0xf]
        %v823 = vld [vmem:[%s8 + $0x1c] sm:$0xf]
        %v824 = vld [vmem:[%s8 + $0x20] sm:$0xf]
        %v825 = vld [vmem:[%s8 + $0x24] sm:$0xf]
        %v826 = vld [vmem:[%s8 + $0x28] sm:$0xf]
        %v827 = vld [vmem:[%s8 + $0x2c] sm:$0xf]
        %v828 = vld [vmem:[%s8 + $0x30] sm:$0xf]
        %v829 = vld [vmem:[%s8 + $0x34] sm:$0xf]
        %v830 = vld [vmem:[%s8 + $0x38] sm:$0xf]
        %v831 = vld [vmem:[%s8 + $0x3c] sm:$0xf]
        %v832 = vld [vmem:[%s9] sm:$0x1]
        %v849 = vunpack.c.l.b16 %v816
        %v850 = vunpack.c.l.b16 %v817
        %v851 = vunpack.c.l.b16 %v818
        %v852 = vunpack.c.l.b16 %v819
        %v853 = vunpack.c.l.b16 %v820
        %v854 = vunpack.c.l.b16 %v821
        %v855 = vunpack.c.l.b16 %v822
        %v856 = vunpack.c.l.b16 %v823
        %v857 = vunpack.c.l.b16 %v824
        %v858 = vunpack.c.l.b16 %v825
        %v859 = vunpack.c.l.b16 %v826
        %v860 = vunpack.c.l.b16 %v827
        %v861 = vunpack.c.l.b16 %v828
        %v862 = vunpack.c.l.b16 %v829
        %v863 = vunpack.c.l.b16 %v830
        %v864 = vunpack.c.l.b16 %v831
        %v865 = vpack.c.b16 %v850, %v849
        %v866 = vpack.c.b16 %v852, %v851
        %v867 = vpack.c.b16 %v854, %v853
        %v868 = vpack.c.b16 %v856, %v855
        %v869 = vpack.c.b16 %v858, %v857
        %v870 = vpack.c.b16 %v860, %v859
        %v871 = vpack.c.b16 %v862, %v861
        %v872 = vpack.c.b16 %v864, %v863
        %881 = vmatprep.subr.bf16.mxu0 0
        %882 = vmatpush1.bf16.msra.mxu0 %v865
        %883 = vmatprep.subr.bf16.mxu0 0
        %884 = vmatpush1.bf16.msra.mxu0 %v866
        %885 = vmatprep.subr.bf16.mxu0 0
        %886 = vmatpush1.bf16.msra.mxu0 %v867
        %887 = vmatprep.subr.bf16.mxu0 0
        %888 = vmatpush1.bf16.msra.mxu0 %v868
        %889 = vmatprep.subr.bf16.mxu0 0
        %890 = vmatpush1.bf16.msra.mxu0 %v869
        %891 = vmatprep.subr.bf16.mxu0 0
        %892 = vmatpush1.bf16.msra.mxu0 %v870
        %893 = vmatprep.subr.bf16.mxu0 0
        %894 = vmatpush1.bf16.msra.mxu0 %v871
        %895 = vmatprep.subr.bf16.mxu0 0
        %896 = vmatpush1.bf16.msra.mxu0 %v872
        %897 = vmatprep.subr.bf16.mxu0 0
        %898 = vmatpush1.bf16.msra.mxu0 0
        %899 = vmatprep.subr.bf16.mxu0 0
        %900 = vmatpush1.bf16.msra.mxu0 0
        %901 = vmatprep.subr.bf16.mxu0 0
        %902 = vmatpush1.bf16.msra.mxu0 0
        %903 = vmatprep.subr.bf16.mxu0 0
        %904 = vmatpush1.bf16.msra.mxu0 0
        %905 = vmatprep.subr.bf16.mxu0 0
        %906 = vmatpush1.bf16.msra.mxu0 0
        %907 = vmatprep.subr.bf16.mxu0 0
        %908 = vmatpush1.bf16.msra.mxu0 0
        %909 = vmatprep.subr.bf16.mxu0 0
        %910 = vmatpush1.bf16.msra.mxu0 0
        %911 = vmatprep.subr.bf16.mxu0 0
        %912 = vmatpush1.bf16.msra.mxu0 0
        %913 = vmatprep.mubr.bf16.mxu0 0
        %914 = vmatmul.mubr.bf16.gmra.mrb[0].mxu0 %v815
        %v915 = vpop.f32.mrb[0].mxu0
        %v916 = vadd.f32 %v832, %v915
        %v917 = vpop.f32.mrb[0].mxu0
        %v918 = vpop.f32.mrb[0].mxu0
        %v919 = vpop.f32.mrb[0].mxu0
        %920 = vdwg.mxu0
        %921 = vst [vmem:[%s460] sm:$0x1] %v916
        %s922 = sand.u32 %s260, 1
        %s923 = scalar_lea.sflag [#allocation5], %s922
        %s924 = sand.u32 %s260, 1
        %s925 = scalar_lea.vmem [#allocation14], %s924
        // Predicated region
        $region85: #{tpu_custom_call.1} parent=59 // pred_check
          %p926 = pneg %p270
        $region86: #{tpu_custom_call.1} parent=59 // pred_check_branch
          %928 = sbr.rel (%p926) target = $region88
        $region87: #{tpu_custom_call.1} parent=59 // pred_region
          %s930 = ssub.s32 16, 16
          %931 = vsyncadd %s923, %s930
          %s932 = smul.addr %s32, 16
          %s933 = scalar_lea.hbm %s10, %s932
          %s935 = sshll.u32 %s925, 4
          %s936 = int_to_ptr.vmem [resolvable:$true] %s935
          %938 = dma.vmem_to_hbm [thread:$0]  %s936, 16, %s933, %s923
        $region88: #{tpu_custom_call.1} parent=59 // pred_fallthru
          _
      $region60: #{tpu_custom_call.1} parent=5 // pred_fallthru
        _
      %p939 = scmp.le.s32.totalorder 2, %s27
      // Predicated region
      $region89: #{tpu_custom_call.1} parent=5 // pred_check
        %p940 = pneg %p939
      $region90: #{tpu_custom_call.1} parent=5 // pred_check_branch
        %942 = sbr.rel (%p940) target = $region92
      $region91: #{tpu_custom_call.1} parent=5 // pred_region
        %s943 = ssub.s32 %s27, 2
        // Predicated region
        $region93: #{tpu_custom_call.1} parent=91 // pred_check
          %p944 = pneg %p276
        $region94: #{tpu_custom_call.1} parent=91 // pred_check_branch
          %946 = sbr.rel (%p944) target = $region96
        $region95: #{tpu_custom_call.1} parent=91 // pred_region
          %s947 = sand.u32 %s261, 1
          %s948 = scalar_lea.sflag [#allocation5], %s947
          %s949 = sand.u32 %s261, 1
          %s950 = scalar_lea.vmem [#allocation14], %s949
          %951 = dma.done %s948, 16
        $region96: #{tpu_custom_call.1} parent=91 // pred_fallthru
          _
      $region92: #{tpu_custom_call.1} parent=5 // pred_fallthru
        _
    $region6: #{tpu_custom_call.1} parent=1 // loop_footer
      %s31 = sadd.s32 1, %s27
    $region7: #{tpu_custom_call.1} parent=1 // loop_footer_branch
      %26 = sbr.rel target = $region3
    $region8: #{tpu_custom_call.1} parent=1 // loop_exit
      _
    %952 = vsyncpa [#allocation4], 1
    %s953 = scalar_lea.sflag [#allocation4], 1
    %954 = vsyncpa %s953, 1
    %955 = vsyncpa [#allocation7], 1
    %956 = vsyncpa [#allocation10], 1
    %957 = vsyncpa [#allocation13], 1
    %958 = vsyncpa [#allocation5], 1
    %s959 = scalar_lea.sflag [#allocation5], 1
    %960 = vsyncpa %s959, 1

</llo_original>
